<compile_context>
chip_gen: v6e
topology: v6e:2x2x1
jax: 0.10.0
libtpu: 0.0.40
codegen_flags: <defaults>
</compile_context>

<pallas_src>
import functools

import jax
import jax.numpy as jnp
from jax import lax
from jax.experimental import pallas as pl
from jax.experimental.pallas import tpu as pltpu


# ---------------------------------------------------------------------------
# Kernel 1: VMEM-resident embedding table (fast path)
# ---------------------------------------------------------------------------
def _embed_kernel_resident(ids_ref, tok_ref, pos_ref, out_ref, *, ts, s):
    # ids_ref : SMEM [N]   int32  flattened token ids (scalar prefetch)
    # tok_ref : VMEM [V, D]       embedding table, resident (constant index_map)
    # pos_ref : VMEM [S, D]       positional encodings, resident
    # out_ref : VMEM [TS, D]      dense output tile (TS = BB*S tokens)
    t = pl.program_id(0)
    base = t * ts

    # In-VMEM gather: one dynamic row load per token from the resident table,
    # stored lane-dense (D spans the full lane axis) into the output tile.
    def gather_row(i, _):
        row = ids_ref[base + i]
        out_ref[pl.ds(i, 1), :] = tok_ref[pl.ds(row, 1), :]
        return 0

    lax.fori_loop(0, ts, gather_row, 0, unroll=8 if ts % 8 == 0 else 1)

    # Dense positional add, one whole (S, D) sequence at a time (tiles always
    # cover whole sequences, so offsets stay S-aligned).
    # TODO(synk): nn.Dropout in training mode would mask/scale here
    # (pltpu.prng_random_bits); eval-mode forward is the identity.
    def add_pos(j, _):
        off = pl.multiple_of(j * s, s)
        out_ref[pl.ds(off, s), :] = (
            out_ref[pl.ds(off, s), :] + pos_ref[...]
        ).astype(out_ref.dtype)
        return 0

    lax.fori_loop(0, ts // s, add_pos, 0)


# ---------------------------------------------------------------------------
# Kernel 2: DMA row-gather from HBM (fallback when the table does not fit VMEM)
# ---------------------------------------------------------------------------
def _embed_kernel_dma(ids_ref, tok_hbm, pos_ref, out_ref, tok_buf, sem, *, ts, cs):
    # ids_ref : SMEM [N]        int32  flattened token ids (scalar prefetch)
    # tok_hbm : HBM  [V, D]            embedding table (memory_space=pl.ANY)
    # pos_ref : VMEM [CS, D]           one chunk's worth of replicated pos rows
    # out_ref : VMEM [TS, D]           dense output tile
    # tok_buf : VMEM [2, CS, D]        double-buffered gather scratch
    # sem     : DMA semaphores [2]
    t = pl.program_id(0)
    base = t * ts
    n_chunks = ts // cs

    def start_chunk(c, slot):
        # Issue CS row-gather DMAs (all kept in flight before any wait).
        def issue(i, _):
            row = ids_ref[base + c * cs + i]
            pltpu.make_async_copy(
                tok_hbm.at[pl.ds(row, 1)],
                tok_buf.at[slot, pl.ds(i, 1)],
                sem.at[slot],
            ).start()
            return 0

        lax.fori_loop(0, cs, issue, 0, unroll=8 if cs % 8 == 0 else 1)

    def wait_chunk(slot):
        # ONE wait per chunk: DMA semaphores count bytes, so a single descriptor
        # sized like the whole chunk matches the cs per-row copies issued above.
        pltpu.make_async_copy(
            tok_hbm.at[pl.ds(0, cs)],
            tok_buf.at[slot],
            sem.at[slot],
        ).wait()

    # Prime the pipeline with chunk 0.
    start_chunk(0, 0)

    def chunk_body(c, _):
        slot = c & 1

        # Prefetch next chunk into the other buffer while chunk c completes.
        @pl.when(c + 1 < n_chunks)
        def _():
            start_chunk(c + 1, 1 - slot)

        wait_chunk(slot)

        off = pl.multiple_of(c * cs, cs)
        out_ref[pl.ds(off, cs), :] = (tok_buf[slot] + pos_ref[...]).astype(out_ref.dtype)
        return 0

    lax.fori_loop(0, n_chunks, chunk_body, 0)


# ---------------------------------------------------------------------------
# Tile-size heuristics
# ---------------------------------------------------------------------------
def _pick_block_batch(batch, seq, target_tokens, max_tile_tokens):
    """Sequences per tile. (BB*S, D) output blocks must be 8-row aligned unless
    they cover the full array. Prefers >= 2 grid steps (megacore) and the
    largest tile under the soft target / hard VMEM cap."""
    full = batch * seq
    cands = [d for d in range(1, batch + 1)
             if batch % d == 0 and ((d * seq) % 8 == 0 or d * seq == full)]

    def score(d):
        toks = d * seq
        return (
            toks <= max_tile_tokens,                   # fit the VMEM budget
            (batch // d) >= 2 or batch == 1,           # keep >= 2 grid steps
            toks <= target_tokens,                     # stay near the soft target
            toks if toks <= target_tokens else -toks,  # then biggest (or least-over)
        )

    return max(cands, key=score)


def _pick_chunk_seqs(bb, seq, d, dsize, budget_bytes=1 << 20):
    """Sequences per gather chunk (fallback path): biggest chunk under ~1 MiB
    while keeping >= 2 chunks per tile so the double buffer actually overlaps."""
    def score(c):
        chunk_bytes = c * seq * d * dsize
        return (chunk_bytes <= budget_bytes, bb // c >= 2, c)

    return max((c for c in range(1, bb + 1) if bb % c == 0), key=score)


# ---------------------------------------------------------------------------
# Wrapper
# ---------------------------------------------------------------------------
def transformer_embedding(ids, tok_table, pos_table, *, target_tokens=4096,
                          force_dma_gather=False):
    """ids: [B, S] int; tok_table: [V, D]; pos_table: [max_len, D]."""
    B, S = ids.shape
    V, D = tok_table.shape
    max_len = pos_table.shape[0]
    if S > max_len:
        raise ValueError(f"seq_len {S} exceeds positional table max_len {max_len}")

    dtype = tok_table.dtype
    dsize = jnp.dtype(dtype).itemsize
    N = B * S

    # Generation-aware VMEM budget (v5e/v6e: 128 MiB, v7x: 64 MiB per core).
    try:
        vmem_cap = int(pltpu.get_tpu_info().vmem_capacity_bytes)
    except Exception:
        vmem_cap = 64 * 1024 * 1024          # conservative default (v7x per-core)
    vmem_budget = (3 * vmem_cap) // 4        # leave headroom for compiler scratch

    # Clamp ids so an out-of-range token cannot drive an OOB gather.
    # TODO(synk): for very large B*S, switch ids to per-tile SMEM blocks to
    # bound the 1-D SMEM padding (next_pow2(4N) bytes).
    ids_flat = jnp.clip(ids.astype(jnp.int32), 0, V - 1).reshape(N)
    pos_slice = pos_table[:S].astype(dtype)  # (S, D), resident in VMEM

    table_bytes = V * D * dsize
    pos_bytes = S * D * dsize
    row_bytes = D * dsize

    # Resident path feasibility: table + pos (worst-case double-buffered) plus
    # at least a one-sequence output tile must fit the budget.
    resident_fixed = 2 * table_bytes + 2 * pos_bytes
    use_resident = (not force_dma_gather) and (
        resident_fixed + 2 * S * row_bytes <= vmem_budget)

    if use_resident:
        max_tile_tokens = max(S, (vmem_budget - resident_fixed) // (2 * row_bytes))
        BB = _pick_block_batch(B, S, target_tokens, max_tile_tokens)
        TS = BB * S
        need = resident_fixed + 2 * TS * row_bytes
        vmem_limit = int(min(int(0.9 * vmem_cap), max(2 * need, 32 << 20)))

        grid_spec = pltpu.PrefetchScalarGridSpec(
            num_scalar_prefetch=1,                               # flat ids -> SMEM
            grid=(N // TS,),
            in_specs=[
                pl.BlockSpec((V, D), lambda t, ids_r: (0, 0)),   # VMEM-resident table
                pl.BlockSpec((S, D), lambda t, ids_r: (0, 0)),   # VMEM-resident pos
            ],
            out_specs=pl.BlockSpec((TS, D), lambda t, ids_r: (t, 0)),
        )
        out_flat = pl.pallas_call(
            functools.partial(_embed_kernel_resident, ts=TS, s=S),
            out_shape=jax.ShapeDtypeStruct((N, D), dtype),
            grid_spec=grid_spec,
            compiler_params=pltpu.CompilerParams(
                dimension_semantics=("parallel",),
                vmem_limit_bytes=vmem_limit,
            ),
        )(ids_flat, tok_table, pos_slice)
    else:
        max_tile_tokens = max(S, (vmem_budget // 2) // (2 * row_bytes))
        BB = _pick_block_batch(B, S, target_tokens, max_tile_tokens)
        TS = BB * S
        CB = _pick_chunk_seqs(BB, S, D, dsize)
        CS = CB * S
        # Positional slab only as large as ONE gather chunk (not the whole tile).
        pos_chunk = jnp.tile(pos_slice, (CB, 1))                 # (CS, D)
        need = 2 * TS * row_bytes + 4 * CS * row_bytes
        vmem_limit = int(min(int(0.9 * vmem_cap), max(2 * need, 32 << 20)))

        grid_spec = pltpu.PrefetchScalarGridSpec(
            num_scalar_prefetch=1,
            grid=(N // TS,),
            in_specs=[
                pl.BlockSpec(memory_space=pl.ANY),               # table stays in HBM
                pl.BlockSpec((CS, D), lambda t, ids_r: (0, 0)),  # resident pos chunk
            ],
            out_specs=pl.BlockSpec((TS, D), lambda t, ids_r: (t, 0)),
            scratch_shapes=[
                pltpu.VMEM((2, CS, D), dtype),
                pltpu.SemaphoreType.DMA((2,)),
            ],
        )
        out_flat = pl.pallas_call(
            functools.partial(_embed_kernel_dma, ts=TS, cs=CS),
            out_shape=jax.ShapeDtypeStruct((N, D), dtype),
            grid_spec=grid_spec,
            compiler_params=pltpu.CompilerParams(
                dimension_semantics=("parallel",),
                vmem_limit_bytes=vmem_limit,
            ),
        )(ids_flat, tok_table, pos_chunk)

    return out_flat.reshape(B, S, D)


# ---------------------------------------------------------------------------
# Parameter construction (plain-JAX glue, deterministic)
# ---------------------------------------------------------------------------
def make_positional_encoding(max_len, d_model):
    # Standard sinusoidal PE: pair i uses frequency 10000**(2i/d_model)
    # (the intended semantics of the reference module's even/odd sin/cos fill).
    pos = jnp.arange(max_len, dtype=jnp.float32)[:, None]            # [max_len, 1]
    two_i = jnp.arange(0, d_model, 2, dtype=jnp.float32)             # [D/2]
    angle = pos / jnp.power(10000.0, two_i / float(d_model))         # [max_len, D/2]
    pe = jnp.zeros((max_len, d_model), dtype=jnp.float32)
    pe = pe.at[:, 0::2].set(jnp.sin(angle))
    pe = pe.at[:, 1::2].set(jnp.cos(angle))
    return pe


def make_token_embedding(key, vocab_size, d_model):
    # nn.Embedding default init: N(0, 1); padding_idx=1 row is zeroed.
    w = jax.random.normal(key, (vocab_size, d_model), dtype=jnp.float32)
    w = w.at[1, :].set(0.0)
    return w


# ---------------------------------------------------------------------------
# Pure-JAX reference
# ---------------------------------------------------------------------------
def reference(ids, tok_table, pos_table):
    tok = tok_table[ids]                       # [B, S, D]
    pos = pos_table[: ids.shape[1], :]         # [S, D]
    return tok + pos[None, :, :]               # dropout == identity (eval)


if __name__ == "__main__":
    # Small shapes consistent with the module (d_model lane-dense at 128).
    vocab_size, d_model, max_len = 64, 128, 16
    B, S = 2, 8
    drop_prob = 0.1  # unused in eval-mode forward

    key = jax.random.PRNGKey(0)
    k_ids, k_emb = jax.random.split(key)

    ids = jax.random.randint(k_ids, (B, S), 0, vocab_size, dtype=jnp.int32)
    tok_table = make_token_embedding(k_emb, vocab_size, d_model)
    pos_table = make_positional_encoding(max_len, d_model)

    out = transformer_embedding(ids, tok_table, pos_table)
    out = jax.block_until_ready(out)

    ref = reference(ids, tok_table, pos_table)
    assert out.shape == (B, S, d_model)
    assert jnp.allclose(out, ref, atol=1e-6, rtol=1e-6)

    print("KERNEL_OK")
</pallas_src>

<mosaic_0001>
module attributes {stable_mosaic.version = 11 : i64} {
  func.func @_embed_kernel_resident(%arg0: i32, %arg1: memref<16xi32, #tpu.memory_space<smem>>, %arg2: memref<64x128xf32, #tpu.memory_space<vmem>>, %arg3: memref<8x128xf32, #tpu.memory_space<vmem>>, %arg4: memref<8x128xf32, #tpu.memory_space<vmem>>) attributes {dimension_semantics = [#tpu.dimension_semantics<parallel>], iteration_bounds = array<i64: 2>, scalar_prefetch = 1 : i64, scratch_operands = 0 : i64, tpu.core_type = #tpu.core_type<tc>, window_params = [{pipeline_mode = #tpu.pipeline_mode<synchronous>, transform_indices = @transform_0, window_bounds = array<i64: 64, 128>}, {pipeline_mode = #tpu.pipeline_mode<synchronous>, transform_indices = @transform_1, window_bounds = array<i64: 8, 128>}, {transform_indices = @transform_2, window_bounds = array<i64: 8, 128>}]} {
    %c8_i32 = arith.constant 8 : i32
    %0 = arith.muli %arg0, %c8_i32 : i32
    %c0_i32 = arith.constant 0 : i32
    %1 = arith.addi %0, %c0_i32 : i32
    %2 = arith.index_cast %1 : i32 to index
    %3 = memref.load %arg1[%2] : memref<16xi32, #tpu.memory_space<smem>>
    %4 = arith.index_cast %3 : i32 to index
    %c0 = arith.constant 0 : index
    %5 = vector.load %arg2[%4, %c0] : memref<64x128xf32, #tpu.memory_space<vmem>>, vector<1x128xf32>
    %6 = arith.index_cast %c0_i32 : i32 to index
    %c0_0 = arith.constant 0 : index
    %7 = vector.load %arg4[%6, %c0_0] : memref<8x128xf32, #tpu.memory_space<vmem>>, vector<1x128xf32>
    tpu.vector_store %arg4[%6, %c0_0], %5 {strides = array<i32>} : memref<8x128xf32, #tpu.memory_space<vmem>>, vector<1x128xf32>,
    %c1_i32 = arith.constant 1 : i32
    %8 = arith.addi %0, %c1_i32 : i32
    %9 = arith.index_cast %8 : i32 to index
    %10 = memref.load %arg1[%9] : memref<16xi32, #tpu.memory_space<smem>>
    %11 = arith.index_cast %10 : i32 to index
    %c0_1 = arith.constant 0 : index
    %12 = vector.load %arg2[%11, %c0_1] : memref<64x128xf32, #tpu.memory_space<vmem>>, vector<1x128xf32>
    %13 = arith.index_cast %c1_i32 : i32 to index
    %c0_2 = arith.constant 0 : index
    %14 = vector.load %arg4[%13, %c0_2] : memref<8x128xf32, #tpu.memory_space<vmem>>, vector<1x128xf32>
    tpu.vector_store %arg4[%13, %c0_2], %12 {strides = array<i32>} : memref<8x128xf32, #tpu.memory_space<vmem>>, vector<1x128xf32>,
    %c2_i32 = arith.constant 2 : i32
    %15 = arith.addi %0, %c2_i32 : i32
    %16 = arith.index_cast %15 : i32 to index
    %17 = memref.load %arg1[%16] : memref<16xi32, #tpu.memory_space<smem>>
    %18 = arith.index_cast %17 : i32 to index
    %c0_3 = arith.constant 0 : index
    %19 = vector.load %arg2[%18, %c0_3] : memref<64x128xf32, #tpu.memory_space<vmem>>, vector<1x128xf32>
    %20 = arith.index_cast %c2_i32 : i32 to index
    %c0_4 = arith.constant 0 : index
    %21 = vector.load %arg4[%20, %c0_4] : memref<8x128xf32, #tpu.memory_space<vmem>>, vector<1x128xf32>
    tpu.vector_store %arg4[%20, %c0_4], %19 {strides = array<i32>} : memref<8x128xf32, #tpu.memory_space<vmem>>, vector<1x128xf32>,
    %c3_i32 = arith.constant 3 : i32
    %22 = arith.addi %0, %c3_i32 : i32
    %23 = arith.index_cast %22 : i32 to index
    %24 = memref.load %arg1[%23] : memref<16xi32, #tpu.memory_space<smem>>
    %25 = arith.index_cast %24 : i32 to index
    %c0_5 = arith.constant 0 : index
    %26 = vector.load %arg2[%25, %c0_5] : memref<64x128xf32, #tpu.memory_space<vmem>>, vector<1x128xf32>
    %27 = arith.index_cast %c3_i32 : i32 to index
    %c0_6 = arith.constant 0 : index
    %28 = vector.load %arg4[%27, %c0_6] : memref<8x128xf32, #tpu.memory_space<vmem>>, vector<1x128xf32>
    tpu.vector_store %arg4[%27, %c0_6], %26 {strides = array<i32>} : memref<8x128xf32, #tpu.memory_space<vmem>>, vector<1x128xf32>,
    %c4_i32 = arith.constant 4 : i32
    %29 = arith.addi %0, %c4_i32 : i32
    %30 = arith.index_cast %29 : i32 to index
    %31 = memref.load %arg1[%30] : memref<16xi32, #tpu.memory_space<smem>>
    %32 = arith.index_cast %31 : i32 to index
    %c0_7 = arith.constant 0 : index
    %33 = vector.load %arg2[%32, %c0_7] : memref<64x128xf32, #tpu.memory_space<vmem>>, vector<1x128xf32>
    %34 = arith.index_cast %c4_i32 : i32 to index
    %c0_8 = arith.constant 0 : index
    %35 = vector.load %arg4[%34, %c0_8] : memref<8x128xf32, #tpu.memory_space<vmem>>, vector<1x128xf32>
    tpu.vector_store %arg4[%34, %c0_8], %33 {strides = array<i32>} : memref<8x128xf32, #tpu.memory_space<vmem>>, vector<1x128xf32>,
    %c5_i32 = arith.constant 5 : i32
    %36 = arith.addi %0, %c5_i32 : i32
    %37 = arith.index_cast %36 : i32 to index
    %38 = memref.load %arg1[%37] : memref<16xi32, #tpu.memory_space<smem>>
    %39 = arith.index_cast %38 : i32 to index
    %c0_9 = arith.constant 0 : index
    %40 = vector.load %arg2[%39, %c0_9] : memref<64x128xf32, #tpu.memory_space<vmem>>, vector<1x128xf32>
    %41 = arith.index_cast %c5_i32 : i32 to index
    %c0_10 = arith.constant 0 : index
    %42 = vector.load %arg4[%41, %c0_10] : memref<8x128xf32, #tpu.memory_space<vmem>>, vector<1x128xf32>
    tpu.vector_store %arg4[%41, %c0_10], %40 {strides = array<i32>} : memref<8x128xf32, #tpu.memory_space<vmem>>, vector<1x128xf32>,
    %c6_i32 = arith.constant 6 : i32
    %43 = arith.addi %0, %c6_i32 : i32
    %44 = arith.index_cast %43 : i32 to index
    %45 = memref.load %arg1[%44] : memref<16xi32, #tpu.memory_space<smem>>
    %46 = arith.index_cast %45 : i32 to index
    %c0_11 = arith.constant 0 : index
    %47 = vector.load %arg2[%46, %c0_11] : memref<64x128xf32, #tpu.memory_space<vmem>>, vector<1x128xf32>
    %48 = arith.index_cast %c6_i32 : i32 to index
    %c0_12 = arith.constant 0 : index
    %49 = vector.load %arg4[%48, %c0_12] : memref<8x128xf32, #tpu.memory_space<vmem>>, vector<1x128xf32>
    tpu.vector_store %arg4[%48, %c0_12], %47 {strides = array<i32>} : memref<8x128xf32, #tpu.memory_space<vmem>>, vector<1x128xf32>,
    %c7_i32 = arith.constant 7 : i32
    %50 = arith.addi %0, %c7_i32 : i32
    %51 = arith.index_cast %50 : i32 to index
    %52 = memref.load %arg1[%51] : memref<16xi32, #tpu.memory_space<smem>>
    %53 = arith.index_cast %52 : i32 to index
    %c0_13 = arith.constant 0 : index
    %54 = vector.load %arg2[%53, %c0_13] : memref<64x128xf32, #tpu.memory_space<vmem>>, vector<1x128xf32>
    %55 = arith.index_cast %c7_i32 : i32 to index
    %c0_14 = arith.constant 0 : index
    %56 = vector.load %arg4[%55, %c0_14] : memref<8x128xf32, #tpu.memory_space<vmem>>, vector<1x128xf32>
    tpu.vector_store %arg4[%55, %c0_14], %54 {strides = array<i32>} : memref<8x128xf32, #tpu.memory_space<vmem>>, vector<1x128xf32>,
    %c8_i32_15 = arith.constant 8 : i32
    %c0_i32_16 = arith.constant 0 : i32
    %c8_i32_17 = arith.constant 8 : i32
    %57 = arith.muli %c0_i32_16, %c8_i32_17 : i32
    %58 = tpu.assume_multiple %57, 8 : i32
    %59 = arith.index_cast %58 : i32 to index
    %c0_18 = arith.constant 0 : index
    %60 = vector.load %arg4[%59, %c0_18] : memref<8x128xf32, #tpu.memory_space<vmem>>, vector<8x128xf32>
    %c0_19 = arith.constant 0 : index
    %c0_20 = arith.constant 0 : index
    %61 = vector.load %arg3[%c0_19, %c0_20] : memref<8x128xf32, #tpu.memory_space<vmem>>, vector<8x128xf32>
    %62 = arith.addf %60, %61 : vector<8x128xf32>
    %63 = arith.index_cast %58 : i32 to index
    %c0_21 = arith.constant 0 : index
    %64 = vector.load %arg4[%63, %c0_21] : memref<8x128xf32, #tpu.memory_space<vmem>>, vector<8x128xf32>
    tpu.vector_store %arg4[%63, %c0_21], %62 {strides = array<i32>} : memref<8x128xf32, #tpu.memory_space<vmem>>, vector<8x128xf32>,
    %c1_i32_22 = arith.constant 1 : i32
    return
  }
  func.func @transform_0(%arg0: i32, %arg1: memref<16xi32, #tpu.memory_space<smem>>) -> (i32, i32) {
    %c0_i32 = arith.constant 0 : i32
    %c0_i32_0 = arith.constant 0 : i32
    %c0_i32_1 = arith.constant 0 : i32
    return %c0_i32, %c0_i32_0 : i32, i32
  }
  func.func @transform_1(%arg0: i32, %arg1: memref<16xi32, #tpu.memory_space<smem>>) -> (i32, i32) {
    %c0_i32 = arith.constant 0 : i32
    %c0_i32_0 = arith.constant 0 : i32
    %c0_i32_1 = arith.constant 0 : i32
    return %c0_i32, %c0_i32_0 : i32, i32
  }
  func.func @transform_2(%arg0: i32, %arg1: memref<16xi32, #tpu.memory_space<smem>>) -> (i32, i32) {
    %c0_i32 = arith.constant 0 : i32
    %c0_i32_0 = arith.constant 0 : i32
    return %arg0, %c0_i32 : i32, i32
  }
}

</mosaic_0001>

<llo_original>
// kernel: tpu_custom_call.1
$region0: #{tpu_custom_call.1}
  #allocation0 [shape = 'u32[]', space=smem, size = 0x4, offset = 0x4, fixed_abs, tag = 'smem constant byte address 0x4 - core index']
  #allocation1 [shape = 'u32[144,128]{1,0:T(1,128)}', space=vmem, size = 0x12000, scoped, tag = 'internal scratch']
  #allocation2 [shape = 's32[1]{0}', space=sflag, size = 0x4, scoped, tag = 'scoped memory for tpu_custom_call.1']
  #allocation3 [shape = 'u8[512]{0}', space=smem, size = 0x200, scoped, tag = 'prefetched SMEM operand 0']
  %s0 = inlined_call_operand.hbm [shape: s32[16], index: 0, kind: input, shape index: {}]
  %s1 = inlined_call_operand.hbm [shape: f32[64,128], index: 1, kind: input, shape index: {}]
  %s2 = inlined_call_operand.hbm [shape: f32[8,128], index: 2, kind: input, shape index: {}]
  %s3 = inlined_call_operand.hbm [shape: f32[16,128], index: 3, kind: output, shape index: {}]
  %s4 = sld [smem:[#allocation0]]
  $region49: #{tpu_custom_call.1} parent=0
    _
  %s6 = ssub.s32 1, %s4
  %s7 = scalar_select 0, %s6, %s4
  %9 = dma.hbm_to_smem %s0, 16, [#allocation3], [#allocation2]
  %10 = dma.done [#allocation2], 16
  %11 = sfence
  $region1: #{tpu_custom_call.1} parent=0
    #allocation4 [shape = 'u8[32768]{0}', space=vmem, size = 0x8000, scoped, tag = 'input window, operand 1, single buffered']
    #allocation5 [shape = 's32[2]{0}', space=sflag, size = 0x8, scoped, tag = 'scoped memory for tpu_custom_call.1']
    #allocation6 [shape = 's32[2]{0}', space=sflag, size = 0x8, scoped, tag = 'scoped memory for tpu_custom_call.1']
    #allocation7 [shape = 'u8[4096]{0}', space=vmem, size = 0x1000, scoped, tag = 'input window, operand 2, single buffered']
    #allocation8 [shape = 's32[1]{0}', space=sflag, size = 0x4, scoped, tag = 'scoped memory for tpu_custom_call.1']
    #allocation9 [shape = 'u8[8192]{0}', space=vmem, size = 0x2000, scoped, tag = 'output window, operand 0']
    %12 = vsyncpa [#allocation5], 0
    %13 = vsyncpa [#allocation8], 0
    %14 = vsyncpa [#allocation6], 0
    %s15 = scalar_lea.sflag [#allocation6], 1
    %16 = vsyncpa %s15, 0
    loop: start=0, step=1, limit=4
    $region2: #{tpu_custom_call.1} parent=1 // loop_pre_header
      _
    $region3: #{tpu_custom_call.1} parent=1 // loop_header
      %s18 = sphi 0, %s22
      %p19 = scmp.ge.s32.totalorder %s18, 4
      %s26 = sphi 0, %s26
      %s28 = sphi 0, %s26
      %s29 = sphi 0, %s28
      %s43 = sphi 0, %s29
      %s47 = sphi 0, %s47
      %s49 = sphi 0, %s47
      %s50 = sphi 0, %s49
      %s64 = sphi 0, %s50
      %s70 = sphi 0, %s72
      %s73 = sphi 0, %s70
      %s74 = sphi 0, %s73
      %s90 = sphi 0, %s74
    $region4: #{tpu_custom_call.1} parent=1 // loop_header_branch
      %21 = sbr.rel (%p19) target = $region8
    $region5: #{tpu_custom_call.1} parent=1 // loop_body
      %s23 = ssub.s32 %s18, 1
      %s24 = ssub.s32 %s18, 2
      %s25 = sadd.s32 %s18, 1
      %s27 = sadd.s32 %s26, 1
      %p30 = scmp.eq.s32.totalorder %s18, 1
      %p31 = scmp.ne.s32.totalorder %s26, %s28
      %p32 = scmp.eq.s32.totalorder %s18, 0
      %p33 = por %p31, %p32
      %p34 = scmp.ne.s32.totalorder %s26, %s28
      %p35 = scmp.eq.s32.totalorder %s23, 1
      %p36 = por %p34, %p35
      %p37 = scmp.ne.s32.totalorder %s28, %s29
      %p38 = scmp.eq.s32.totalorder %s23, 0
      %p39 = por %p37, %p38
      %p40 = scmp.ne.s32.totalorder %s28, %s29
      %p41 = scmp.eq.s32.totalorder %s24, 1
      %p42 = por %p40, %p41
      %p44 = scmp.ne.s32.totalorder %s29, %s43
      %p45 = scmp.eq.s32.totalorder %s24, 0
      %p46 = por %p44, %p45
      %s48 = sadd.s32 %s47, 1
      %p51 = scmp.eq.s32.totalorder %s18, 1
      %p52 = scmp.ne.s32.totalorder %s47, %s49
      %p53 = scmp.eq.s32.totalorder %s18, 0
      %p54 = por %p52, %p53
      %p55 = scmp.ne.s32.totalorder %s47, %s49
      %p56 = scmp.eq.s32.totalorder %s23, 1
      %p57 = por %p55, %p56
      %p58 = scmp.ne.s32.totalorder %s49, %s50
      %p59 = scmp.eq.s32.totalorder %s23, 0
      %p60 = por %p58, %p59
      %p61 = scmp.ne.s32.totalorder %s49, %s50
      %p62 = scmp.eq.s32.totalorder %s24, 1
      %p63 = por %p61, %p62
      %p65 = scmp.ne.s32.totalorder %s50, %s64
      %p66 = scmp.eq.s32.totalorder %s24, 0
      %p67 = por %p65, %p66
      %s68 = ssub.s32 %s18, %s25
      %p69 = scmp.eq.s32.totalorder %s68, 0
      %s71 = sadd.s32 %s70, 1
      %s72 = scalar_select %p69, %s70, %s71
      %p75 = pneg %p69
      %p76 = scmp.eq.s32.totalorder %s18, 1
      %p77 = por %p75, %p76
      %p78 = scmp.ne.s32.totalorder %s70, %s73
      %p79 = scmp.eq.s32.totalorder %s18, 0
      %p80 = por %p78, %p79
      %p81 = scmp.ne.s32.totalorder %s70, %s73
      %p82 = scmp.eq.s32.totalorder %s23, 1
      %p83 = por %p81, %p82
      %p84 = scmp.ne.s32.totalorder %s73, %s74
      %p85 = scmp.eq.s32.totalorder %s23, 0
      %p86 = por %p84, %p85
      %p87 = scmp.ne.s32.totalorder %s73, %s74
      %p88 = scmp.eq.s32.totalorder %s24, 1
      %p89 = por %p87, %p88
      %p91 = scmp.ne.s32.totalorder %s74, %s90
      %p92 = scmp.eq.s32.totalorder %s24, 0
      %p93 = por %p91, %p92
      %p94 = scmp.le.s32.totalorder 1, %s18
      %p95 = scmp.lt.s32.totalorder %s18, 3
      %p96 = pnand %p94, %p95
      %p97 = pneg %p96
      // Predicated region
      $region9: #{tpu_custom_call.1} parent=5 // pred_check
        _
      $region10: #{tpu_custom_call.1} parent=5 // pred_check_branch
        %99 = sbr.rel (%p96) target = $region12
      $region11: #{tpu_custom_call.1} parent=5 // pred_region
        %s100 = ssub.s32 %s18, 1
        // Predicated region
        $region13: #{tpu_custom_call.1} parent=11 // pred_check
          %p101 = pneg %p39
        $region14: #{tpu_custom_call.1} parent=11 // pred_check_branch
          %103 = sbr.rel (%p101) target = $region16
        $region15: #{tpu_custom_call.1} parent=11 // pred_region
          %s105 = ssub.s32 1024, 1024
          %106 = vsyncadd [#allocation5], %s105
          %s107 = sshll.u32 [#allocation4], 4
          %s108 = int_to_ptr.vmem [resolvable:$true] %s107
          %113 = dma.hbm_to_vmem [thread:$0]  %s1, 1024, %s108, [#allocation5], 128, 128, 8
        $region16: #{tpu_custom_call.1} parent=11 // pred_fallthru
          _
        // Predicated region
        $region17: #{tpu_custom_call.1} parent=11 // pred_check
          %p114 = pneg %p60
        $region18: #{tpu_custom_call.1} parent=11 // pred_check_branch
          %116 = sbr.rel (%p114) target = $region20
        $region19: #{tpu_custom_call.1} parent=11 // pred_region
          %s118 = ssub.s32 128, 128
          %119 = vsyncadd [#allocation8], %s118
          %s121 = sshll.u32 [#allocation7], 4
          %s122 = int_to_ptr.vmem [resolvable:$true] %s121
          %124 = dma.hbm_to_vmem [thread:$0]  %s2, 128, %s122, [#allocation8]
        $region20: #{tpu_custom_call.1} parent=11 // pred_fallthru
          _
      $region12: #{tpu_custom_call.1} parent=5 // pred_fallthru
        _
      %p125 = scmp.lt.s32.totalorder %s18, 2
      // Predicated region
      $region21: #{tpu_custom_call.1} parent=5 // pred_check
        %p126 = pneg %p125
      $region22: #{tpu_custom_call.1} parent=5 // pred_check_branch
        %128 = sbr.rel (%p126) target = $region24
      $region23: #{tpu_custom_call.1} parent=5 // pred_region
        _
      $region24: #{tpu_custom_call.1} parent=5 // pred_fallthru
        _
      %p129 = scmp.le.s32.totalorder 1, %s18
      %p130 = scmp.lt.s32.totalorder %s18, 3
      %p131 = pnand %p129, %p130
      %p132 = pneg %p131
      // Predicated region
      $region25: #{tpu_custom_call.1} parent=5 // pred_check
        _
      $region26: #{tpu_custom_call.1} parent=5 // pred_check_branch
        %134 = sbr.rel (%p131) target = $region28
      $region27: #{tpu_custom_call.1} parent=5 // pred_region
        %s135 = ssub.s32 %s18, 1
        // Predicated region
        $region29: #{tpu_custom_call.1} parent=27 // pred_check
          %p136 = pneg %p39
        $region30: #{tpu_custom_call.1} parent=27 // pred_check_branch
          %138 = sbr.rel (%p136) target = $region32
        $region31: #{tpu_custom_call.1} parent=27 // pred_region
          %139 = dma.done [#allocation5], 1024
        $region32: #{tpu_custom_call.1} parent=27 // pred_fallthru
          _
        // Predicated region
        $region33: #{tpu_custom_call.1} parent=27 // pred_check
          %p140 = pneg %p60
        $region34: #{tpu_custom_call.1} parent=27 // pred_check_branch
          %142 = sbr.rel (%p140) target = $region36
        $region35: #{tpu_custom_call.1} parent=27 // pred_region
          %143 = dma.done [#allocation8], 128
        $region36: #{tpu_custom_call.1} parent=27 // pred_fallthru
          _
        %p144 = pneg %p39
        %p145 = pneg %p36
        %p146 = pneg %p60
        %p147 = pneg %p57
        %p148 = pneg %p86
        %p149 = pneg %p83
        %s150 = sand.u32 %s73, 1
        %s151 = scalar_lea.sflag [#allocation6], %s150
        %s152 = sand.u32 %s73, 1
        %s153 = smul.addr %s152, 8
        %s154 = scalar_lea.vmem [#allocation9], %s153
        %s155 = smul.u32 %s23, 8
        %s156 = sld [smem:[#allocation3 + %s155]]
        %s157 = scalar_lea.vmem [#allocation4], %s156
        %v158 = vld [vmem:[%s157] sm:$0x1]
        %159 = vst [vmem:[%s154] sm:$0x1] %v158
        %s160 = sadd.s32 %s155, 1
        %s161 = sld [smem:[#allocation3 + %s160]]
        %s162 = scalar_lea.vmem [#allocation4], %s161
        %v163 = vld [vmem:[%s162] sm:$0x1]
        %164 = vst [vmem:[%s154 + $0x1] sm:$0x1] %v163
        %s165 = sadd.s32 %s155, 2
        %s166 = sld [smem:[#allocation3 + %s165]]
        %s167 = scalar_lea.vmem [#allocation4], %s166
        %v168 = vld [vmem:[%s167] sm:$0x1]
        %169 = vst [vmem:[%s154 + $0x2] sm:$0x1] %v168
        %s170 = sadd.s32 %s155, 3
        %s171 = sld [smem:[#allocation3 + %s170]]
        %s172 = scalar_lea.vmem [#allocation4], %s171
        %v173 = vld [vmem:[%s172] sm:$0x1]
        %174 = vst [vmem:[%s154 + $0x3] sm:$0x1] %v173
        %s175 = sadd.s32 %s155, 4
        %s176 = sld [smem:[#allocation3 + %s175]]
        %s177 = scalar_lea.vmem [#allocation4], %s176
        %v178 = vld [vmem:[%s177] sm:$0x1]
        %179 = vst [vmem:[%s154 + $0x4] sm:$0x1] %v178
        %s180 = sadd.s32 %s155, 5
        %s181 = sld [smem:[#allocation3 + %s180]]
        %s182 = scalar_lea.vmem [#allocation4], %s181
        %v183 = vld [vmem:[%s182] sm:$0x1]
        %184 = vst [vmem:[%s154 + $0x5] sm:$0x1] %v183
        %s185 = sadd.s32 %s155, 6
        %s186 = sld [smem:[#allocation3 + %s185]]
        %s187 = scalar_lea.vmem [#allocation4], %s186
        %v188 = vld [vmem:[%s187] sm:$0x1]
        %189 = vst [vmem:[%s154 + $0x6] sm:$0x1] %v188
        %s190 = sadd.s32 %s155, 7
        %s191 = sld [smem:[#allocation3 + %s190]]
        %s192 = scalar_lea.vmem [#allocation4], %s191
        %v193 = vld [vmem:[%s192] sm:$0x1]
        %194 = vst [vmem:[%s154 + $0x7] sm:$0x1] %v193
        %v195 = vld [vmem:[%s154] sm:$0xff]
        %v196 = vld [vmem:[#allocation7] sm:$0xff]
        %v197 = vadd.f32 %v195, %v196
        %198 = vst [vmem:[%s154] sm:$0xff] %v197
        %s199 = sand.u32 %s73, 1
        %s200 = scalar_lea.sflag [#allocation6], %s199
        %s201 = sand.u32 %s73, 1
        %s202 = smul.addr %s201, 8
        %s203 = scalar_lea.vmem [#allocation9], %s202
        // Predicated region
        $region37: #{tpu_custom_call.1} parent=27 // pred_check
          %p204 = pneg %p83
        $region38: #{tpu_custom_call.1} parent=27 // pred_check_branch
          %206 = sbr.rel (%p204) target = $region40
        $region39: #{tpu_custom_call.1} parent=27 // pred_region
          %s208 = ssub.s32 128, 128
          %209 = vsyncadd %s200, %s208
          %s210 = smul.addr %s23, 128
          %s211 = scalar_lea.hbm %s3, %s210
          %s213 = sshll.u32 %s203, 4
          %s214 = int_to_ptr.vmem [resolvable:$true] %s213
          %216 = dma.vmem_to_hbm [thread:$0]  %s214, 128, %s211, %s200
        $region40: #{tpu_custom_call.1} parent=27 // pred_fallthru
          _
      $region28: #{tpu_custom_call.1} parent=5 // pred_fallthru
        _
      %p217 = scmp.le.s32.totalorder 2, %s18
      // Predicated region
      $region41: #{tpu_custom_call.1} parent=5 // pred_check
        %p218 = pneg %p217
      $region42: #{tpu_custom_call.1} parent=5 // pred_check_branch
        %220 = sbr.rel (%p218) target = $region44
      $region43: #{tpu_custom_call.1} parent=5 // pred_region
        %s221 = ssub.s32 %s18, 2
        // Predicated region
        $region45: #{tpu_custom_call.1} parent=43 // pred_check
          %p222 = pneg %p89
        $region46: #{tpu_custom_call.1} parent=43 // pred_check_branch
          %224 = sbr.rel (%p222) target = $region48
        $region47: #{tpu_custom_call.1} parent=43 // pred_region
          %s225 = sand.u32 %s74, 1
          %s226 = scalar_lea.sflag [#allocation6], %s225
          %s227 = sand.u32 %s74, 1
          %s228 = smul.addr %s227, 8
          %s229 = scalar_lea.vmem [#allocation9], %s228
          %230 = dma.done %s226, 128
        $region48: #{tpu_custom_call.1} parent=43 // pred_fallthru
          _
      $region44: #{tpu_custom_call.1} parent=5 // pred_fallthru
        _
    $region6: #{tpu_custom_call.1} parent=1 // loop_footer
      %s22 = sadd.s32 1, %s18
    $region7: #{tpu_custom_call.1} parent=1 // loop_footer_branch
      %17 = sbr.rel target = $region3
    $region8: #{tpu_custom_call.1} parent=1 // loop_exit
      _
    %231 = vsyncpa [#allocation5], 1
    %s232 = scalar_lea.sflag [#allocation5], 1
    %233 = vsyncpa %s232, 1
    %234 = vsyncpa [#allocation8], 1
    %235 = vsyncpa [#allocation6], 1
    %s236 = scalar_lea.sflag [#allocation6], 1
    %237 = vsyncpa %s236, 1

</llo_original>
